<compile_context>
chip_gen: v7x
topology: tpu7x:2x2x1
jax: 0.10.0
libtpu: 0.0.40
codegen_flags: <defaults>
</compile_context>

<pallas_src>
import functools

import jax
import jax.numpy as jnp
from jax.experimental import pallas as pl
from jax.experimental.pallas import tpu as pltpu

_LANE = 128  # lane width of a vreg
_SUB = 8     # sublanes per vreg


def _bce_kernel(yp_ref, y_ref, out_ref, *, valid_elems, need_mask, eps):
    br = yp_ref.shape[0]  # block rows (multiple of 8)

    yp = yp_ref[...].astype(jnp.float32)
    yt = y_ref[...].astype(jnp.float32)

    # Keep log() finite for y_prim in {0, 1}; no-op otherwise.
    yp = jnp.clip(yp, eps, 1.0 - eps)

    # Elementwise log-likelihood (general form: soft targets supported).
    term = yt * jnp.log(yp) + (1.0 - yt) * jnp.log(1.0 - yp)

    if need_mask:
        # Zero the padded tail (flat element index >= valid_elems).
        row = jax.lax.broadcasted_iota(jnp.int32, (br, _LANE), 0)
        lane = jax.lax.broadcasted_iota(jnp.int32, (br, _LANE), 1)
        flat = (pl.program_id(0) * br + row) * _LANE + lane
        term = jnp.where(flat < valid_elems, term, 0.0)

    # Sublane-grouped partial sum: pure VPU adds of aligned (8, 128) vregs.
    # The cross-lane/sublane reduction is deferred to the tiny JAX epilogue.
    partial = term.reshape(br // _SUB, _SUB, _LANE).sum(axis=0)
    out_ref[...] = partial[None, :, :]


def bce_loss(y_prim, y, *, max_block_rows=1024):
    """Pallas implementation of LossBCE.forward. Returns a float32 scalar."""
    assert y_prim.shape == y.shape
    n = int(y_prim.size)

    yp = y_prim.reshape(-1)
    yt = y.reshape(-1)

    # Lane-dense tiling: rows of 128 elements, blocks of `block_rows` rows.
    rows = pl.cdiv(n, _LANE)
    block_rows = min(max_block_rows, pl.cdiv(rows, _SUB) * _SUB)
    num_blocks = pl.cdiv(rows, block_rows)
    rows_padded = num_blocks * block_rows
    pad = rows_padded * _LANE - n
    if pad:
        # Pad value 0.5 keeps the (masked) padded terms finite.
        yp = jnp.pad(yp, (0, pad), constant_values=0.5)
        yt = jnp.pad(yt, (0, pad), constant_values=0.5)
    yp2 = yp.reshape(rows_padded, _LANE)
    yt2 = yt.reshape(rows_padded, _LANE)

    kernel = functools.partial(
        _bce_kernel, valid_elems=n, need_mask=(pad > 0), eps=1e-7
    )

    partials = pl.pallas_call(
        kernel,
        out_shape=jax.ShapeDtypeStruct((num_blocks, _SUB, _LANE), jnp.float32),
        grid_spec=pltpu.PrefetchScalarGridSpec(
            num_scalar_prefetch=0,
            grid=(num_blocks,),
            in_specs=[
                pl.BlockSpec((block_rows, _LANE), lambda i: (i, 0)),
                pl.BlockSpec((block_rows, _LANE), lambda i: (i, 0)),
            ],
            out_specs=pl.BlockSpec((1, _SUB, _LANE), lambda i: (i, 0, 0)),
        ),
        compiler_params=pltpu.CompilerParams(
            # Independent partial sums -> parallel grid axis (both TCs on v7x).
            dimension_semantics=("parallel",),
        ),
    )(yp2, yt2)

    # Tiny epilogue on the host-side JAX graph: full reduce, mean, negate.
    return -(jnp.sum(partials) / n)


if __name__ == "__main__":
    key = jax.random.PRNGKey(0)
    k1, k2, k3, k4 = jax.random.split(key, 4)

    # Classification-head-style shapes: batch=16, classes=16.
    B, C = 16, 16
    y_prim = jax.nn.sigmoid(jax.random.normal(k1, (B, C), dtype=jnp.float32))
    y = jax.random.bernoulli(k2, p=0.5, shape=(B, C)).astype(jnp.float32)

    loss = jax.block_until_ready(bce_loss(y_prim, y))
    ref = -jnp.mean(y * jnp.log(y_prim) + (1.0 - y) * jnp.log(1.0 - y_prim))
    assert jnp.allclose(loss, ref, rtol=1e-5, atol=1e-6), (loss, ref)

    # Odd shape (exercises the masked tail) with soft targets.
    B2, C2 = 7, 13
    yp_odd = jax.nn.sigmoid(jax.random.normal(k3, (B2, C2), dtype=jnp.float32))
    y_odd = jax.random.uniform(k4, (B2, C2), dtype=jnp.float32)
    loss2 = jax.block_until_ready(bce_loss(yp_odd, y_odd))
    ref2 = -jnp.mean(
        y_odd * jnp.log(yp_odd) + (1.0 - y_odd) * jnp.log(1.0 - yp_odd)
    )
    assert jnp.allclose(loss2, ref2, rtol=1e-5, atol=1e-6), (loss2, ref2)

    print("KERNEL_OK")
</pallas_src>

<mosaic_0001>
module attributes {stable_mosaic.version = 11 : i64} {
  func.func @_bce_kernel(%arg0: i32, %arg1: memref<8x128xf32, #tpu.memory_space<vmem>>, %arg2: memref<8x128xf32, #tpu.memory_space<vmem>>, %arg3: memref<1x8x128xf32, #tpu.memory_space<vmem>>) attributes {dimension_semantics = [#tpu.dimension_semantics<parallel>], iteration_bounds = array<i64: 1>, scalar_prefetch = 0 : i64, scratch_operands = 0 : i64, tpu.core_type = #tpu.core_type<tc>, window_params = [{transform_indices = @transform_0, window_bounds = array<i64: 8, 128>}, {transform_indices = @transform_1, window_bounds = array<i64: 8, 128>}, {transform_indices = @transform_2, window_bounds = array<i64: 1, 8, 128>}]} {
    %c0 = arith.constant 0 : index
    %c0_0 = arith.constant 0 : index
    %0 = vector.load %arg1[%c0, %c0_0] : memref<8x128xf32, #tpu.memory_space<vmem>>, vector<8x128xf32>
    %c0_1 = arith.constant 0 : index
    %c0_2 = arith.constant 0 : index
    %1 = vector.load %arg2[%c0_1, %c0_2] : memref<8x128xf32, #tpu.memory_space<vmem>>, vector<8x128xf32>
    %cst = arith.constant 1.000000e-07 : f32
    %cst_3 = arith.constant 0.99999988 : f32
    %2 = vector.broadcast %cst : f32 to vector<8x128xf32>
    %3 = arith.maximumf %2, %0 : vector<8x128xf32>
    %4 = vector.broadcast %cst_3 : f32 to vector<8x128xf32>
    %5 = arith.minimumf %4, %3 : vector<8x128xf32>
    %6 = math.log %5 : vector<8x128xf32>
    %7 = arith.mulf %1, %6 : vector<8x128xf32>
    %cst_4 = arith.constant 1.000000e+00 : f32
    %8 = vector.broadcast %cst_4 : f32 to vector<8x128xf32>
    %9 = arith.subf %8, %1 : vector<8x128xf32>
    %cst_5 = arith.constant 1.000000e+00 : f32
    %10 = vector.broadcast %cst_5 : f32 to vector<8x128xf32>
    %11 = arith.subf %10, %5 : vector<8x128xf32>
    %12 = math.log %11 : vector<8x128xf32>
    %13 = arith.mulf %9, %12 : vector<8x128xf32>
    %14 = arith.addf %7, %13 : vector<8x128xf32>
    %15 = tpu.iota {dimensions = array<i32: 0>} : vector<8x128xi32>
    %16 = tpu.iota {dimensions = array<i32: 1>} : vector<8x128xi32>
    %c8_i32 = arith.constant 8 : i32
    %17 = arith.muli %arg0, %c8_i32 : i32
    %18 = vector.broadcast %17 : i32 to vector<8x128xi32>
    %19 = arith.addi %18, %15 : vector<8x128xi32>
    %c128_i32 = arith.constant 128 : i32
    %20 = vector.broadcast %c128_i32 : i32 to vector<8x128xi32>
    %21 = arith.muli %19, %20 : vector<8x128xi32>
    %22 = arith.addi %21, %16 : vector<8x128xi32>
    %c256_i32 = arith.constant 256 : i32
    %23 = vector.broadcast %c256_i32 : i32 to vector<8x128xi32>
    %24 = arith.cmpi slt, %22, %23 : vector<8x128xi32>
    %cst_6 = arith.constant 0.000000e+00 : f32
    %25 = vector.broadcast %cst_6 : f32 to vector<8x128xf32>
    %26 = arith.select %24, %14, %25 : vector<8x128xi1>, vector<8x128xf32>
    %27 = vector.shape_cast %26 : vector<8x128xf32> to vector<1x8x128xf32>
    %cst_7 = arith.constant dense<0.000000e+00> : vector<8x128xf32>
    %28 = vector.multi_reduction <add>, %27, %cst_7 [0] : vector<1x8x128xf32> to vector<8x128xf32>
    %29 = vector.shape_cast %28 : vector<8x128xf32> to vector<1x8x128xf32>
    %c0_8 = arith.constant 0 : index
    %c0_9 = arith.constant 0 : index
    %c0_10 = arith.constant 0 : index
    %30 = vector.load %arg3[%c0_8, %c0_9, %c0_10] : memref<1x8x128xf32, #tpu.memory_space<vmem>>, vector<1x8x128xf32>
    tpu.vector_store %arg3[%c0_8, %c0_9, %c0_10], %29 {strides = array<i32>} : memref<1x8x128xf32, #tpu.memory_space<vmem>>, vector<1x8x128xf32>,
    return
  }
  func.func @transform_0(%arg0: i32) -> (i32, i32) {
    %c0_i32 = arith.constant 0 : i32
    %c0_i32_0 = arith.constant 0 : i32
    return %arg0, %c0_i32 : i32, i32
  }
  func.func @transform_1(%arg0: i32) -> (i32, i32) {
    %c0_i32 = arith.constant 0 : i32
    %c0_i32_0 = arith.constant 0 : i32
    return %arg0, %c0_i32 : i32, i32
  }
  func.func @transform_2(%arg0: i32) -> (i32, i32, i32) {
    %c0_i32 = arith.constant 0 : i32
    %c0_i32_0 = arith.constant 0 : i32
    %c0_i32_1 = arith.constant 0 : i32
    return %arg0, %c0_i32, %c0_i32_0 : i32, i32, i32
  }
}

</mosaic_0001>

<llo_original>
// kernel: tpu_custom_call.1
$region0: #{tpu_custom_call.1}
  #allocation0 [shape = 'u32[]', space=smem, size = 0x4, offset = 0x4, fixed_abs, tag = 'smem constant byte address 0x4 - core index']
  #allocation1 [shape = 'u32[144,128]{1,0:T(1,128)}', space=vmem, size = 0x12000, scoped, tag = 'internal scratch']
  %s0 = inlined_call_operand.hbm [shape: f32[8,128], index: 0, kind: input, shape index: {}]
  %s1 = inlined_call_operand.hbm [shape: f32[8,128], index: 1, kind: input, shape index: {}]
  %s2 = inlined_call_operand.hbm [shape: f32[1,8,128], index: 2, kind: output, shape index: {}]
  %s3 = sld [smem:[#allocation0]]
  $region26: #{tpu_custom_call.1} parent=0
    _
  %s5 = ssub.s32 1, %s3
  %s6 = scalar_select 0, %s5, %s3
  $region1: #{tpu_custom_call.1} parent=0
    #allocation2 [shape = 'u8[4096]{0}', space=vmem, size = 0x1000, scoped, tag = 'input window, operand 0, single buffered']
    #allocation3 [shape = 's32[1]{0}', space=sflag, size = 0x4, scoped, tag = 'scoped memory for tpu_custom_call.1']
    #allocation4 [shape = 's32[1]{0}', space=sflag, size = 0x4, scoped, tag = 'scoped memory for tpu_custom_call.1']
    #allocation5 [shape = 'u8[4096]{0}', space=vmem, size = 0x1000, scoped, tag = 'input window, operand 1, single buffered']
    #allocation6 [shape = 's32[1]{0}', space=sflag, size = 0x4, scoped, tag = 'scoped memory for tpu_custom_call.1']
    #allocation7 [shape = 'u8[4096]{0}', space=vmem, size = 0x1000, scoped, tag = 'output window, operand 0, single buffered']
    %7 = vsyncpa [#allocation3], 0
    %8 = vsyncpa [#allocation6], 0
    %9 = vsyncpa [#allocation4], 0
    // Predicated region
    $region2: #{tpu_custom_call.1} parent=1 // pred_check
      _
    $region3: #{tpu_custom_call.1} parent=1 // pred_check_branch
      %11 = sbr.rel (0) target = $region5
    $region4: #{tpu_custom_call.1} parent=1 // pred_region
      %s13 = ssub.s32 128, 128
      %14 = vsyncadd [#allocation3], %s13
      %s16 = sshll.u32 [#allocation2], 4
      %s17 = int_to_ptr.vmem [resolvable:$true] %s16
      %19 = dma.hbm_to_vmem [thread:$0]  %s0, 128, %s17, [#allocation3]
    $region5: #{tpu_custom_call.1} parent=1 // pred_fallthru
      _
    // Predicated region
    $region6: #{tpu_custom_call.1} parent=1 // pred_check
      _
    $region7: #{tpu_custom_call.1} parent=1 // pred_check_branch
      %21 = sbr.rel (0) target = $region9
    $region8: #{tpu_custom_call.1} parent=1 // pred_region
      %s23 = ssub.s32 128, 128
      %24 = vsyncadd [#allocation6], %s23
      %s26 = sshll.u32 [#allocation5], 4
      %s27 = int_to_ptr.vmem [resolvable:$true] %s26
      %29 = dma.hbm_to_vmem [thread:$0]  %s1, 128, %s27, [#allocation6]
    $region9: #{tpu_custom_call.1} parent=1 // pred_fallthru
      _
    // Predicated region
    $region10: #{tpu_custom_call.1} parent=1 // pred_check
      _
    $region11: #{tpu_custom_call.1} parent=1 // pred_check_branch
      %31 = sbr.rel (0) target = $region13
    $region12: #{tpu_custom_call.1} parent=1 // pred_region
      %32 = dma.done [#allocation3], 128
    $region13: #{tpu_custom_call.1} parent=1 // pred_fallthru
      _
    // Predicated region
    $region14: #{tpu_custom_call.1} parent=1 // pred_check
      _
    $region15: #{tpu_custom_call.1} parent=1 // pred_check_branch
      %34 = sbr.rel (0) target = $region17
    $region16: #{tpu_custom_call.1} parent=1 // pred_region
      %35 = dma.done [#allocation6], 128
    $region17: #{tpu_custom_call.1} parent=1 // pred_fallthru
      _
    %v36 = vld [vmem:[#allocation2] sm:$0xff]
    %v37 = vld [vmem:[#allocation5] sm:$0xff]
    %v38 = vmax.f32 %v36, 1e-07
    %v39 = vmin.f32 %v38, 0.9999999
    %v40 = vlog2.pop %v39
    %v41 = vmul.f32 %v40, 0.6931472
    %v42 = vmul.f32 %v37, %v41
    %v43 = vsub.f32 1.0, %v37
    %v44 = vsub.f32 1.0, %v39
    %v45 = vlog2.pop %v44
    %v46 = vmul.f32 %v45, 0.6931472
    %v47 = vmul.f32 %v43, %v46
    %v48 = vadd.f32 %v42, %v47
    %v49 = vlaneseq
    %v50 = vshrl.u32 %v49, 7
    %v51 = vlaneseq
    %v52 = vand.u32 %v51, 127
    %s53 = smul.u32 0, 8
    %v54 = vstv %s53
    %v55 = vadd.s32 %v54, %v50
    %v56 = vmul.u32 %v55, 128
    %v57 = vadd.s32 %v56, %v52
    %vm58 = vcmp.lt.s32.totalorder %v57, 256
    %v59 = vsel %vm58, %v48, 0.0
    %v60 = vadd.f32 %v59, 0.0
    %61 = vst [vmem:[#allocation7] sm:$0xff] %v60
    // Predicated region
    $region18: #{tpu_custom_call.1} parent=1 // pred_check
      _
    $region19: #{tpu_custom_call.1} parent=1 // pred_check_branch
      %63 = sbr.rel (0) target = $region21
    $region20: #{tpu_custom_call.1} parent=1 // pred_region
      %s65 = ssub.s32 128, 128
      %66 = vsyncadd [#allocation4], %s65
      %s68 = sshll.u32 [#allocation7], 4
      %s69 = int_to_ptr.vmem [resolvable:$true] %s68
      %71 = dma.vmem_to_hbm [thread:$0]  %s69, 128, %s2, [#allocation4]
    $region21: #{tpu_custom_call.1} parent=1 // pred_fallthru
      _
    // Predicated region
    $region22: #{tpu_custom_call.1} parent=1 // pred_check
      _
    $region23: #{tpu_custom_call.1} parent=1 // pred_check_branch
      %73 = sbr.rel (0) target = $region25
    $region24: #{tpu_custom_call.1} parent=1 // pred_region
      %74 = dma.done [#allocation4], 128
    $region25: #{tpu_custom_call.1} parent=1 // pred_fallthru
      _
    %75 = vsyncpa [#allocation3], 1
    %76 = vsyncpa [#allocation6], 1
    %77 = vsyncpa [#allocation4], 1

</llo_original>
